<compile_context>
chip_gen: v7x
topology: tpu7x:2x2x1
jax: 0.10.0
libtpu: 0.0.40
codegen_flags: <defaults>
</compile_context>

<pallas_src>
import functools
import math

import jax
import jax.numpy as jnp
from jax.experimental import pallas as pl
from jax.experimental.pallas import tpu as pltpu


# ----------------------------------------------------------------------------
# Sinusoidal table (identical to the PyTorch __init__, batch axis squeezed).
# ----------------------------------------------------------------------------
def make_pe_table(max_len: int, d_model: int, dtype=jnp.float32):
    assert d_model % 2 == 0, "d_model must be even (as in the PyTorch module)"
    position = jnp.arange(max_len, dtype=jnp.float32)[:, None]            # [L, 1]
    div_term = jnp.exp(
        jnp.arange(0, d_model, 2, dtype=jnp.float32) * (-math.log(10000.0) / d_model)
    )                                                                     # [D/2]
    angles = position * div_term                                          # [L, D/2]
    pe = jnp.zeros((max_len, d_model), dtype=jnp.float32)
    pe = pe.at[:, 0::2].set(jnp.sin(angles))
    pe = pe.at[:, 1::2].set(jnp.cos(angles))
    return pe.astype(dtype)


# ----------------------------------------------------------------------------
# Kernels
# ----------------------------------------------------------------------------
def _posenc_kernel(x_ref, pe_ref, o_ref, *, repeats: int):
    """Eval mode: out = x + pe (dropout is identity). Pure VPU add."""
    pe = pe_ref[...]                                    # (ts, W)
    if repeats > 1:
        # 128-aligned lane replication of pe to the full B*D width; XLU/copy
        # work only, hidden under the HBM-bound DMA pipeline.
        pe = jnp.tile(pe, (1, repeats))                 # (ts, B*D)
    o_ref[...] = x_ref[...] + pe


def _posenc_dropout_kernel(seed_ref, x_ref, pe_ref, o_ref, *,
                           repeats: int, keep_threshold: int, inv_keep: float):
    """Training mode: inverted dropout in the integer domain on HW PRNG bits.

    Same Bernoulli(1-p) / scale-by-1/(1-p) semantics as torch.nn.Dropout
    (not bit-identical to torch's RNG stream). Needs a real TPU backend
    (hardware PRNG has no CPU/interpret lowering).
    """
    pe = pe_ref[...]
    if repeats > 1:
        pe = jnp.tile(pe, (1, repeats))
    y = x_ref[...] + pe

    # Mix the user seed with the grid step so tiles get decorrelated streams.
    pltpu.prng_seed(seed_ref[0], pl.program_id(0))
    bits = pltpu.prng_random_bits(y.shape)
    if bits.dtype != jnp.uint32:
        bits = pltpu.bitcast(bits, jnp.uint32)
    keep = bits >= jnp.uint32(keep_threshold)           # P(keep) = 1 - p
    o_ref[...] = jnp.where(keep, y * inv_keep, 0.0).astype(o_ref.dtype)


# ----------------------------------------------------------------------------
# Tiling helpers
# ----------------------------------------------------------------------------
def _pe_lane_width(batch: int, d_model: int) -> int:
    """Smallest lane width W with W % D == 0, (B*D) % W == 0, W % 128 == 0.

    Falls back to the full B*D width when no such W exists (lane density is
    unattainable there anyway; the block then equals the full last dim)."""
    lcm = d_model * 128 // math.gcd(d_model, 128)
    bd = batch * d_model
    return lcm if bd % lcm == 0 else bd


def _auto_seq_tile(seq_len: int, row_bytes: int,
                   max_block_bytes: int = 8 * 1024 * 1024) -> int:
    """Largest multiple-of-8 divisor of seq_len whose block fits the byte
    budget, preferring >= 2 grid steps (pipelining + megacore sharding)."""
    cap_rows = max(8, max_block_bytes // max(1, row_bytes))

    def best_divisor(limit):
        best, t = None, 8
        while t <= limit:
            if seq_len % t == 0:
                best = t
            t += 8
        return best

    best = best_divisor(min(cap_rows, seq_len // 2))   # prefer >= 2 steps
    if best is None:
        best = best_divisor(min(cap_rows, seq_len))
    return best if best is not None else seq_len       # tiny / awkward S


# ----------------------------------------------------------------------------
# Wrapper
# ----------------------------------------------------------------------------
def positional_encoding(x, pe_table, *, p: float = 0.1, training: bool = False,
                        seed: int = 0, seq_tile: int | None = None):
    """x: [S, B, D]; pe_table: [max_len, D] with max_len >= S."""
    S, B, D = x.shape
    assert pe_table.shape[0] >= S and pe_table.shape[1] == D
    assert 0.0 <= p < 1.0, "dropout p must be in [0, 1)"

    BD = B * D
    itemsize = jnp.dtype(x.dtype).itemsize

    # Lane-dense view of x / out (free reshape of contiguous trailing dims).
    x_flat = x.reshape(S, BD)

    # pe stays narrow in HBM: width W (multiple of 128 when possible); the
    # kernel replicates it to B*D lanes. For D already a multiple of 128 this
    # is exactly pe_table[:S] (no wrapper work at all).
    W = _pe_lane_width(B, D)
    reps_wrapper = W // D
    pe_s = pe_table[:S].astype(x.dtype)
    pe_w = pe_s if reps_wrapper == 1 else jnp.tile(pe_s, (1, reps_wrapper))
    repeats_kernel = BD // W

    # Sequence tiling.
    if seq_tile is None:
        row_bytes = (2 * BD + W) * itemsize            # x + out + pe per seq row
        ts = _auto_seq_tile(S, row_bytes)
    else:
        if S % seq_tile != 0:
            raise ValueError(f"seq_tile={seq_tile} must divide seq_len={S}")
        if seq_tile != S and seq_tile % 8 != 0:
            raise ValueError("seq_tile must be a multiple of 8 (TPU sublane "
                             "tiling) or equal seq_len")
        ts = seq_tile
    grid = (S // ts,)

    cost = pl.CostEstimate(
        flops=(3 if (training and p > 0.0) else 1) * S * BD,
        transcendentals=0,
        bytes_accessed=(2 * S * BD + S * W) * itemsize)
    cparams = pltpu.CompilerParams(
        dimension_semantics=("parallel",),
        vmem_limit_bytes=32 * 1024 * 1024)
    out_shape = jax.ShapeDtypeStruct((S, BD), x.dtype)

    if training and p > 0.0:
        keep_threshold = min(int(p * 4294967296.0), 4294967295)
        kernel = functools.partial(
            _posenc_dropout_kernel, repeats=repeats_kernel,
            keep_threshold=keep_threshold, inv_keep=1.0 / (1.0 - p))
        grid_spec = pltpu.PrefetchScalarGridSpec(
            num_scalar_prefetch=1, grid=grid,
            in_specs=[pl.BlockSpec((ts, BD), lambda i, s: (i, 0)),
                      pl.BlockSpec((ts, W), lambda i, s: (i, 0))],
            out_specs=pl.BlockSpec((ts, BD), lambda i, s: (i, 0)))
        out_flat = pl.pallas_call(
            kernel, out_shape=out_shape, grid_spec=grid_spec,
            compiler_params=cparams, cost_estimate=cost,
        )(jnp.asarray([seed], dtype=jnp.int32), x_flat, pe_w)
    else:
        # Eval mode: dropout is identity; no seed scalar is prefetched.
        kernel = functools.partial(_posenc_kernel, repeats=repeats_kernel)
        grid_spec = pltpu.PrefetchScalarGridSpec(
            num_scalar_prefetch=0, grid=grid,
            in_specs=[pl.BlockSpec((ts, BD), lambda i: (i, 0)),
                      pl.BlockSpec((ts, W), lambda i: (i, 0))],
            out_specs=pl.BlockSpec((ts, BD), lambda i: (i, 0)))
        out_flat = pl.pallas_call(
            kernel, out_shape=out_shape, grid_spec=grid_spec,
            compiler_params=cparams, cost_estimate=cost,
        )(x_flat, pe_w)

    return out_flat.reshape(S, B, D)


# ----------------------------------------------------------------------------
# Demo / self-test
# ----------------------------------------------------------------------------
if __name__ == "__main__":
    d_model = 32
    max_len = 64
    seq_len = 16
    batch = 4      # B * D = 128 -> lane-dense folded layout

    key = jax.random.PRNGKey(0)
    x = jax.random.normal(key, (seq_len, batch, d_model), dtype=jnp.float32)
    pe_table = make_pe_table(max_len, d_model)

    ref = x + pe_table[:seq_len][:, None, :]

    # Eval mode (dropout == identity), auto seq tiling (2 grid steps here).
    out = jax.block_until_ready(positional_encoding(x, pe_table, p=0.1, training=False))
    assert out.shape == (seq_len, batch, d_model)
    assert jnp.allclose(out, ref, atol=1e-6, rtol=1e-6)

    # Single-block path via an explicit seq_tile (covers ts == S).
    out_full = jax.block_until_ready(
        positional_encoding(x, pe_table, p=0.1, training=False, seq_tile=seq_len))
    assert jnp.allclose(out_full, ref, atol=1e-6, rtol=1e-6)

    # Non-lane-dense batch (B*D = 96) exercises the full-width fallback path.
    x_odd = jax.random.normal(jax.random.PRNGKey(1), (seq_len, 3, d_model),
                              dtype=jnp.float32)
    ref_odd = x_odd + pe_table[:seq_len][:, None, :]
    out_odd = jax.block_until_ready(
        positional_encoding(x_odd, pe_table, p=0.1, training=False))
    assert jnp.allclose(out_odd, ref_odd, atol=1e-6, rtol=1e-6)

    # Training dropout uses the TPU hardware PRNG (pltpu.prng_*), which has no
    # CPU / interpret-mode lowering -> only exercise it on a real TPU backend.
    if jax.default_backend() == "tpu":
        p = 0.1
        out_train = jax.block_until_ready(
            positional_encoding(x, pe_table, p=p, training=True, seed=123))
        assert out_train.shape == (seq_len, batch, d_model)
        kept = out_train != 0.0
        # Dropped elements are exactly 0; kept ones equal (x + pe) / (1 - p).
        assert jnp.allclose(jnp.where(kept, out_train, 0.0),
                            jnp.where(kept, ref * (1.0 / (1.0 - p)), 0.0),
                            atol=1e-5, rtol=1e-5)

    print("KERNEL_OK")
</pallas_src>

<mosaic_0001>
module attributes {stable_mosaic.version = 11 : i64} {
  func.func @_posenc_kernel(%arg0: i32, %arg1: memref<8x128xf32, #tpu.memory_space<vmem>>, %arg2: memref<8x128xf32, #tpu.memory_space<vmem>>, %arg3: memref<8x128xf32, #tpu.memory_space<vmem>>) attributes {dimension_semantics = [#tpu.dimension_semantics<parallel>], iteration_bounds = array<i64: 2>, scalar_prefetch = 0 : i64, scratch_operands = 0 : i64, tpu.core_type = #tpu.core_type<tc>, window_params = [{transform_indices = @transform_0, window_bounds = array<i64: 8, 128>}, {transform_indices = @transform_1, window_bounds = array<i64: 8, 128>}, {transform_indices = @transform_2, window_bounds = array<i64: 8, 128>}]} {
    %c0 = arith.constant 0 : index
    %c0_0 = arith.constant 0 : index
    %0 = vector.load %arg2[%c0, %c0_0] : memref<8x128xf32, #tpu.memory_space<vmem>>, vector<8x128xf32>
    %c0_1 = arith.constant 0 : index
    %c0_2 = arith.constant 0 : index
    %1 = vector.load %arg1[%c0_1, %c0_2] : memref<8x128xf32, #tpu.memory_space<vmem>>, vector<8x128xf32>
    %2 = arith.addf %1, %0 : vector<8x128xf32>
    %c0_3 = arith.constant 0 : index
    %c0_4 = arith.constant 0 : index
    %3 = vector.load %arg3[%c0_3, %c0_4] : memref<8x128xf32, #tpu.memory_space<vmem>>, vector<8x128xf32>
    tpu.vector_store %arg3[%c0_3, %c0_4], %2 {strides = array<i32>} : memref<8x128xf32, #tpu.memory_space<vmem>>, vector<8x128xf32>,
    return
  }
  func.func @transform_0(%arg0: i32) -> (i32, i32) {
    %c0_i32 = arith.constant 0 : i32
    %c0_i32_0 = arith.constant 0 : i32
    return %arg0, %c0_i32 : i32, i32
  }
  func.func @transform_1(%arg0: i32) -> (i32, i32) {
    %c0_i32 = arith.constant 0 : i32
    %c0_i32_0 = arith.constant 0 : i32
    return %arg0, %c0_i32 : i32, i32
  }
  func.func @transform_2(%arg0: i32) -> (i32, i32) {
    %c0_i32 = arith.constant 0 : i32
    %c0_i32_0 = arith.constant 0 : i32
    return %arg0, %c0_i32 : i32, i32
  }
}

</mosaic_0001>

<llo_original>
// kernel: tpu_custom_call.1
$region0: #{tpu_custom_call.1}
  #allocation0 [shape = 'u32[]', space=smem, size = 0x4, offset = 0x4, fixed_abs, tag = 'smem constant byte address 0x4 - core index']
  #allocation1 [shape = 'u32[144,128]{1,0:T(1,128)}', space=vmem, size = 0x12000, scoped, tag = 'internal scratch']
  %s0 = inlined_call_operand.hbm [shape: f32[16,128], index: 0, kind: input, shape index: {}]
  %s1 = inlined_call_operand.hbm [shape: f32[16,128], index: 1, kind: input, shape index: {}]
  %s2 = inlined_call_operand.hbm [shape: f32[16,128], index: 2, kind: output, shape index: {}]
  %s3 = sld [smem:[#allocation0]]
  $region49: #{tpu_custom_call.1} parent=0
    _
  %s5 = ssub.s32 1, %s3
  %s6 = scalar_select 0, %s5, %s3
  $region1: #{tpu_custom_call.1} parent=0
    #allocation2 [shape = 'u8[8192]{0}', space=vmem, size = 0x2000, scoped, tag = 'input window, operand 0']
    #allocation3 [shape = 's32[2]{0}', space=sflag, size = 0x8, scoped, tag = 'scoped memory for tpu_custom_call.1']
    #allocation4 [shape = 's32[2]{0}', space=sflag, size = 0x8, scoped, tag = 'scoped memory for tpu_custom_call.1']
    #allocation5 [shape = 'u8[8192]{0}', space=vmem, size = 0x2000, scoped, tag = 'input window, operand 1']
    #allocation6 [shape = 's32[2]{0}', space=sflag, size = 0x8, scoped, tag = 'scoped memory for tpu_custom_call.1']
    #allocation7 [shape = 'u8[8192]{0}', space=vmem, size = 0x2000, scoped, tag = 'output window, operand 0']
    %7 = vsyncpa [#allocation3], 0
    %s8 = scalar_lea.sflag [#allocation3], 1
    %9 = vsyncpa %s8, 0
    %10 = vsyncpa [#allocation6], 0
    %s11 = scalar_lea.sflag [#allocation6], 1
    %12 = vsyncpa %s11, 0
    %13 = vsyncpa [#allocation4], 0
    %s14 = scalar_lea.sflag [#allocation4], 1
    %15 = vsyncpa %s14, 0
    loop: start=0, step=1, limit=4
    $region2: #{tpu_custom_call.1} parent=1 // loop_pre_header
      _
    $region3: #{tpu_custom_call.1} parent=1 // loop_header
      %s17 = sphi 0, %s21
      %p18 = scmp.ge.s32.totalorder %s17, 4
      %s27 = sphi 0, %s29
      %s30 = sphi 0, %s27
      %s31 = sphi 0, %s30
      %s47 = sphi 0, %s31
      %s53 = sphi 0, %s55
      %s56 = sphi 0, %s53
      %s57 = sphi 0, %s56
      %s73 = sphi 0, %s57
      %s79 = sphi 0, %s81
      %s82 = sphi 0, %s79
      %s83 = sphi 0, %s82
      %s99 = sphi 0, %s83
    $region4: #{tpu_custom_call.1} parent=1 // loop_header_branch
      %20 = sbr.rel (%p18) target = $region8
    $region5: #{tpu_custom_call.1} parent=1 // loop_body
      %s22 = ssub.s32 %s17, 1
      %s23 = ssub.s32 %s17, 2
      %s24 = sadd.s32 %s17, 1
      %s25 = ssub.s32 %s17, %s24
      %p26 = scmp.eq.s32.totalorder %s25, 0
      %s28 = sadd.s32 %s27, 1
      %s29 = scalar_select %p26, %s27, %s28
      %p32 = pneg %p26
      %p33 = scmp.eq.s32.totalorder %s17, 1
      %p34 = por %p32, %p33
      %p35 = scmp.ne.s32.totalorder %s27, %s30
      %p36 = scmp.eq.s32.totalorder %s17, 0
      %p37 = por %p35, %p36
      %p38 = scmp.ne.s32.totalorder %s27, %s30
      %p39 = scmp.eq.s32.totalorder %s22, 1
      %p40 = por %p38, %p39
      %p41 = scmp.ne.s32.totalorder %s30, %s31
      %p42 = scmp.eq.s32.totalorder %s22, 0
      %p43 = por %p41, %p42
      %p44 = scmp.ne.s32.totalorder %s30, %s31
      %p45 = scmp.eq.s32.totalorder %s23, 1
      %p46 = por %p44, %p45
      %p48 = scmp.ne.s32.totalorder %s31, %s47
      %p49 = scmp.eq.s32.totalorder %s23, 0
      %p50 = por %p48, %p49
      %s51 = ssub.s32 %s17, %s24
      %p52 = scmp.eq.s32.totalorder %s51, 0
      %s54 = sadd.s32 %s53, 1
      %s55 = scalar_select %p52, %s53, %s54
      %p58 = pneg %p52
      %p59 = scmp.eq.s32.totalorder %s17, 1
      %p60 = por %p58, %p59
      %p61 = scmp.ne.s32.totalorder %s53, %s56
      %p62 = scmp.eq.s32.totalorder %s17, 0
      %p63 = por %p61, %p62
      %p64 = scmp.ne.s32.totalorder %s53, %s56
      %p65 = scmp.eq.s32.totalorder %s22, 1
      %p66 = por %p64, %p65
      %p67 = scmp.ne.s32.totalorder %s56, %s57
      %p68 = scmp.eq.s32.totalorder %s22, 0
      %p69 = por %p67, %p68
      %p70 = scmp.ne.s32.totalorder %s56, %s57
      %p71 = scmp.eq.s32.totalorder %s23, 1
      %p72 = por %p70, %p71
      %p74 = scmp.ne.s32.totalorder %s57, %s73
      %p75 = scmp.eq.s32.totalorder %s23, 0
      %p76 = por %p74, %p75
      %s77 = ssub.s32 %s17, %s24
      %p78 = scmp.eq.s32.totalorder %s77, 0
      %s80 = sadd.s32 %s79, 1
      %s81 = scalar_select %p78, %s79, %s80
      %p84 = pneg %p78
      %p85 = scmp.eq.s32.totalorder %s17, 1
      %p86 = por %p84, %p85
      %p87 = scmp.ne.s32.totalorder %s79, %s82
      %p88 = scmp.eq.s32.totalorder %s17, 0
      %p89 = por %p87, %p88
      %p90 = scmp.ne.s32.totalorder %s79, %s82
      %p91 = scmp.eq.s32.totalorder %s22, 1
      %p92 = por %p90, %p91
      %p93 = scmp.ne.s32.totalorder %s82, %s83
      %p94 = scmp.eq.s32.totalorder %s22, 0
      %p95 = por %p93, %p94
      %p96 = scmp.ne.s32.totalorder %s82, %s83
      %p97 = scmp.eq.s32.totalorder %s23, 1
      %p98 = por %p96, %p97
      %p100 = scmp.ne.s32.totalorder %s83, %s99
      %p101 = scmp.eq.s32.totalorder %s23, 0
      %p102 = por %p100, %p101
      %p103 = scmp.le.s32.totalorder 1, %s17
      %p104 = scmp.lt.s32.totalorder %s17, 3
      %p105 = pnand %p103, %p104
      %p106 = pneg %p105
      // Predicated region
      $region9: #{tpu_custom_call.1} parent=5 // pred_check
        _
      $region10: #{tpu_custom_call.1} parent=5 // pred_check_branch
        %108 = sbr.rel (%p105) target = $region12
      $region11: #{tpu_custom_call.1} parent=5 // pred_region
        %s109 = ssub.s32 %s17, 1
      $region12: #{tpu_custom_call.1} parent=5 // pred_fallthru
        _
      %p110 = scmp.lt.s32.totalorder %s17, 2
      // Predicated region
      $region13: #{tpu_custom_call.1} parent=5 // pred_check
        %p111 = pneg %p110
      $region14: #{tpu_custom_call.1} parent=5 // pred_check_branch
        %113 = sbr.rel (%p111) target = $region16
      $region15: #{tpu_custom_call.1} parent=5 // pred_region
        // Predicated region
        $region17: #{tpu_custom_call.1} parent=15 // pred_check
          %p114 = pneg %p37
        $region18: #{tpu_custom_call.1} parent=15 // pred_check_branch
          %116 = sbr.rel (%p114) target = $region20
        $region19: #{tpu_custom_call.1} parent=15 // pred_region
          %s117 = sand.u32 %s27, 1
          %s118 = scalar_lea.sflag [#allocation3], %s117
          %s119 = sand.u32 %s27, 1
          %s120 = smul.addr %s119, 8
          %s121 = scalar_lea.vmem [#allocation2], %s120
          %s123 = ssub.s32 128, 128
          %124 = vsyncadd %s118, %s123
          %s125 = smul.addr %s17, 128
          %s126 = scalar_lea.hbm %s0, %s125
          %s128 = sshll.u32 %s121, 4
          %s129 = int_to_ptr.vmem [resolvable:$true] %s128
          %131 = dma.hbm_to_vmem [thread:$0]  %s126, 128, %s129, %s118
        $region20: #{tpu_custom_call.1} parent=15 // pred_fallthru
          _
        // Predicated region
        $region21: #{tpu_custom_call.1} parent=15 // pred_check
          %p132 = pneg %p63
        $region22: #{tpu_custom_call.1} parent=15 // pred_check_branch
          %134 = sbr.rel (%p132) target = $region24
        $region23: #{tpu_custom_call.1} parent=15 // pred_region
          %s135 = sand.u32 %s53, 1
          %s136 = scalar_lea.sflag [#allocation6], %s135
          %s137 = sand.u32 %s53, 1
          %s138 = smul.addr %s137, 8
          %s139 = scalar_lea.vmem [#allocation5], %s138
          %s141 = ssub.s32 128, 128
          %142 = vsyncadd %s136, %s141
          %s143 = smul.addr %s17, 128
          %s144 = scalar_lea.hbm %s1, %s143
          %s146 = sshll.u32 %s139, 4
          %s147 = int_to_ptr.vmem [resolvable:$true] %s146
          %149 = dma.hbm_to_vmem [thread:$0]  %s144, 128, %s147, %s136
        $region24: #{tpu_custom_call.1} parent=15 // pred_fallthru
          _
      $region16: #{tpu_custom_call.1} parent=5 // pred_fallthru
        _
      %p150 = scmp.le.s32.totalorder 1, %s17
      %p151 = scmp.lt.s32.totalorder %s17, 3
      %p152 = pnand %p150, %p151
      %p153 = pneg %p152
      // Predicated region
      $region25: #{tpu_custom_call.1} parent=5 // pred_check
        _
      $region26: #{tpu_custom_call.1} parent=5 // pred_check_branch
        %155 = sbr.rel (%p152) target = $region28
      $region27: #{tpu_custom_call.1} parent=5 // pred_region
        %s156 = ssub.s32 %s17, 1
        %s157 = sand.u32 %s30, 1
        %s158 = scalar_lea.sflag [#allocation3], %s157
        %s159 = sand.u32 %s30, 1
        %s160 = smul.addr %s159, 8
        %s161 = scalar_lea.vmem [#allocation2], %s160
        // Predicated region
        $region29: #{tpu_custom_call.1} parent=27 // pred_check
          %p162 = pneg %p43
        $region30: #{tpu_custom_call.1} parent=27 // pred_check_branch
          %164 = sbr.rel (%p162) target = $region32
        $region31: #{tpu_custom_call.1} parent=27 // pred_region
          %165 = dma.done %s158, 128
        $region32: #{tpu_custom_call.1} parent=27 // pred_fallthru
          _
        %s166 = sand.u32 %s56, 1
        %s167 = scalar_lea.sflag [#allocation6], %s166
        %s168 = sand.u32 %s56, 1
        %s169 = smul.addr %s168, 8
        %s170 = scalar_lea.vmem [#allocation5], %s169
        // Predicated region
        $region33: #{tpu_custom_call.1} parent=27 // pred_check
          %p171 = pneg %p69
        $region34: #{tpu_custom_call.1} parent=27 // pred_check_branch
          %173 = sbr.rel (%p171) target = $region36
        $region35: #{tpu_custom_call.1} parent=27 // pred_region
          %174 = dma.done %s167, 128
        $region36: #{tpu_custom_call.1} parent=27 // pred_fallthru
          _
        %s175 = sand.u32 %s30, 1
        %s176 = scalar_lea.sflag [#allocation3], %s175
        %s177 = sand.u32 %s30, 1
        %s178 = smul.addr %s177, 8
        %s179 = scalar_lea.vmem [#allocation2], %s178
        %p180 = pneg %p43
        %p181 = pneg %p40
        %s182 = sand.u32 %s56, 1
        %s183 = scalar_lea.sflag [#allocation6], %s182
        %s184 = sand.u32 %s56, 1
        %s185 = smul.addr %s184, 8
        %s186 = scalar_lea.vmem [#allocation5], %s185
        %p187 = pneg %p69
        %p188 = pneg %p66
        %p189 = pneg %p95
        %p190 = pneg %p92
        %s191 = sand.u32 %s82, 1
        %s192 = scalar_lea.sflag [#allocation4], %s191
        %s193 = sand.u32 %s82, 1
        %s194 = smul.addr %s193, 8
        %s195 = scalar_lea.vmem [#allocation7], %s194
        %v196 = vld [vmem:[%s170] sm:$0xff]
        %v197 = vld [vmem:[%s161] sm:$0xff]
        %v198 = vadd.f32 %v197, %v196
        %199 = vst [vmem:[%s195] sm:$0xff] %v198
        %s200 = sand.u32 %s82, 1
        %s201 = scalar_lea.sflag [#allocation4], %s200
        %s202 = sand.u32 %s82, 1
        %s203 = smul.addr %s202, 8
        %s204 = scalar_lea.vmem [#allocation7], %s203
        // Predicated region
        $region37: #{tpu_custom_call.1} parent=27 // pred_check
          %p205 = pneg %p92
        $region38: #{tpu_custom_call.1} parent=27 // pred_check_branch
          %207 = sbr.rel (%p205) target = $region40
        $region39: #{tpu_custom_call.1} parent=27 // pred_region
          %s209 = ssub.s32 128, 128
          %210 = vsyncadd %s201, %s209
          %s211 = smul.addr %s22, 128
          %s212 = scalar_lea.hbm %s2, %s211
          %s214 = sshll.u32 %s204, 4
          %s215 = int_to_ptr.vmem [resolvable:$true] %s214
          %217 = dma.vmem_to_hbm [thread:$0]  %s215, 128, %s212, %s201
        $region40: #{tpu_custom_call.1} parent=27 // pred_fallthru
          _
      $region28: #{tpu_custom_call.1} parent=5 // pred_fallthru
        _
      %p218 = scmp.le.s32.totalorder 2, %s17
      // Predicated region
      $region41: #{tpu_custom_call.1} parent=5 // pred_check
        %p219 = pneg %p218
      $region42: #{tpu_custom_call.1} parent=5 // pred_check_branch
        %221 = sbr.rel (%p219) target = $region44
      $region43: #{tpu_custom_call.1} parent=5 // pred_region
        %s222 = ssub.s32 %s17, 2
        // Predicated region
        $region45: #{tpu_custom_call.1} parent=43 // pred_check
          %p223 = pneg %p98
        $region46: #{tpu_custom_call.1} parent=43 // pred_check_branch
          %225 = sbr.rel (%p223) target = $region48
        $region47: #{tpu_custom_call.1} parent=43 // pred_region
          %s226 = sand.u32 %s83, 1
          %s227 = scalar_lea.sflag [#allocation4], %s226
          %s228 = sand.u32 %s83, 1
          %s229 = smul.addr %s228, 8
          %s230 = scalar_lea.vmem [#allocation7], %s229
          %231 = dma.done %s227, 128
        $region48: #{tpu_custom_call.1} parent=43 // pred_fallthru
          _
      $region44: #{tpu_custom_call.1} parent=5 // pred_fallthru
        _
    $region6: #{tpu_custom_call.1} parent=1 // loop_footer
      %s21 = sadd.s32 1, %s17
    $region7: #{tpu_custom_call.1} parent=1 // loop_footer_branch
      %16 = sbr.rel target = $region3
    $region8: #{tpu_custom_call.1} parent=1 // loop_exit
      _
    %232 = vsyncpa [#allocation3], 1
    %s233 = scalar_lea.sflag [#allocation3], 1
    %234 = vsyncpa %s233, 1
    %235 = vsyncpa [#allocation6], 1
    %s236 = scalar_lea.sflag [#allocation6], 1
    %237 = vsyncpa %s236, 1
    %238 = vsyncpa [#allocation4], 1
    %s239 = scalar_lea.sflag [#allocation4], 1
    %240 = vsyncpa %s239, 1

</llo_original>
